<compile_context>
chip_gen: v6e
topology: v6e:2x2x1
jax: 0.10.0
libtpu: 0.0.40
codegen_flags: <defaults>
</compile_context>

<pallas_src>
import jax
import jax.numpy as jnp
from jax.experimental import pallas as pl
from jax.experimental.pallas import tpu as pltpu

HIDDEN = 128
K_PAD = 128   # padded input-feature dim (lane-dense, full MXU K)
N_PAD = 128   # padded action dim (lane-dense output store)


def _dqn_kernel(x_ref, w1_ref, b1_ref, w2_ref, b2_ref, w3_ref, b3_ref, o_ref):
    # Layer 1: Linear + ReLU  (bf16 operands, f32 MXU accumulate)
    x = x_ref[...].astype(jnp.bfloat16)
    h1 = jnp.dot(x, w1_ref[...], preferred_element_type=jnp.float32)
    h1 = jnp.maximum(h1 + b1_ref[...], 0.0)
    # Layer 2: Linear + ReLU
    h2 = jnp.dot(h1.astype(jnp.bfloat16), w2_ref[...],
                 preferred_element_type=jnp.float32)
    h2 = jnp.maximum(h2 + b2_ref[...], 0.0)
    # Layer 3: Linear (no activation), lane-dense (TB, 128) store
    out = jnp.dot(h2.astype(jnp.bfloat16), w3_ref[...],
                  preferred_element_type=jnp.float32)
    o_ref[...] = (out + b3_ref[...]).astype(o_ref.dtype)


def dqn_forward(x, params, out_dim, *, tb=128):
    """x: [B, input_dim] f32.  params: padded/pre-transposed weights (bf16) +
    biases (f32).  Returns [B, out_dim] f32 Q-values."""
    w1, b1, w2, b2, w3, b3 = (params[k] for k in
                              ("w1", "b1", "w2", "b2", "w3", "b3"))
    B, in_dim = x.shape
    k_pad = w1.shape[0]
    n_pad = w3.shape[1]

    # Zero-pad batch to a multiple of the batch tile and features to K_PAD.
    # Padded rows/cols are sliced off below; zeros are harmless through the MLP.
    b_pad = tb * pl.cdiv(B, tb)
    x_p = jnp.zeros((b_pad, k_pad), x.dtype).at[:B, :in_dim].set(x)

    grid = (b_pad // tb,)
    resident = lambda shape: pl.BlockSpec(shape, lambda i: (0, 0))  # DMA'd once

    out_padded = pl.pallas_call(
        _dqn_kernel,
        out_shape=jax.ShapeDtypeStruct((b_pad, n_pad), jnp.float32),
        grid=grid,
        in_specs=[
            pl.BlockSpec((tb, k_pad), lambda i: (i, 0)),   # x: tiled over batch
            resident(w1.shape), resident(b1.shape),
            resident(w2.shape), resident(b2.shape),
            resident(w3.shape), resident(b3.shape),
        ],
        out_specs=pl.BlockSpec((tb, n_pad), lambda i: (i, 0)),
        compiler_params=pltpu.CompilerParams(
            # batch axis is independent -> megacore-shardable (v7x: 2 TCs)
            dimension_semantics=("parallel",),
            # weights+biases+two (tb,128) buffers are <1 MiB at tb=128; if tb is
            # enlarged for big replay batches, keep 2*tb*128*4B*3 well under
            # v7x's 64 MiB VMEM or raise vmem_limit_bytes explicitly.
        ),
    )(x_p, w1, b1, w2, b2, w3, b3)

    return out_padded[:B, :out_dim]


def init_dqn_params(key, input_dim, output_dim, hidden=HIDDEN):
    """nn.Linear-style U(-1/sqrt(fan_in), 1/sqrt(fan_in)) init.
    Weights stored pre-transposed [in, out], zero-padded to (K_PAD / N_PAD) and
    cast to bf16 (MXU operands); biases stay f32."""
    ks = jax.random.split(key, 6)

    def linear(kw, kb, fan_in, fan_out):
        bound = 1.0 / jnp.sqrt(jnp.float32(fan_in))
        w = jax.random.uniform(kw, (fan_in, fan_out), jnp.float32, -bound, bound)
        b = jax.random.uniform(kb, (1, fan_out), jnp.float32, -bound, bound)
        return w, b

    w1, b1 = linear(ks[0], ks[1], input_dim, hidden)
    w2, b2 = linear(ks[2], ks[3], hidden, hidden)
    w3, b3 = linear(ks[4], ks[5], hidden, output_dim)

    k_pad = max(K_PAD, input_dim)
    n_pad = max(N_PAD, output_dim)
    w1p = jnp.zeros((k_pad, hidden), jnp.float32).at[:input_dim].set(w1)
    w3p = jnp.zeros((hidden, n_pad), jnp.float32).at[:, :output_dim].set(w3)
    b3p = jnp.zeros((1, n_pad), jnp.float32).at[:, :output_dim].set(b3)

    return dict(
        w1=w1p.astype(jnp.bfloat16), b1=b1,
        w2=w2.astype(jnp.bfloat16), b2=b2,
        w3=w3p.astype(jnp.bfloat16), b3=b3p,
    )


def dqn_reference(x, p, out_dim):
    """Pure-JAX reference using the same bf16-operand / f32-accumulate math."""
    in_dim = x.shape[1]
    h = jnp.dot(x.astype(jnp.bfloat16), p["w1"][:in_dim],
                preferred_element_type=jnp.float32) + p["b1"]
    h = jnp.maximum(h, 0.0)
    h = jnp.dot(h.astype(jnp.bfloat16), p["w2"],
                preferred_element_type=jnp.float32) + p["b2"]
    h = jnp.maximum(h, 0.0)
    out = jnp.dot(h.astype(jnp.bfloat16), p["w3"],
                  preferred_element_type=jnp.float32) + p["b3"]
    return out[:, :out_dim]


if __name__ == "__main__":
    key = jax.random.PRNGKey(0)
    k_params, k_x = jax.random.split(key)

    batch = 8        # small batch of Frogger states
    input_dim = 16   # observation size
    output_dim = 4   # number of actions

    params = init_dqn_params(k_params, input_dim, output_dim)
    x = jax.random.normal(k_x, (batch, input_dim), jnp.float32)

    out = dqn_forward(x, params, output_dim)
    jax.block_until_ready(out)

    ref = dqn_reference(x, params, output_dim)
    assert out.shape == (batch, output_dim)
    assert jnp.allclose(out, ref, atol=1e-3, rtol=1e-3), float(
        jnp.max(jnp.abs(out - ref)))

    print("KERNEL_OK")
</pallas_src>

<mosaic_0001>
module attributes {stable_mosaic.version = 11 : i64} {
  func.func @_dqn_kernel(%arg0: i32, %arg1: memref<128x128xf32, #tpu.memory_space<vmem>>, %arg2: memref<128x128xbf16, #tpu.memory_space<vmem>>, %arg3: memref<1x128xf32, #tpu.memory_space<vmem>>, %arg4: memref<128x128xbf16, #tpu.memory_space<vmem>>, %arg5: memref<1x128xf32, #tpu.memory_space<vmem>>, %arg6: memref<128x128xbf16, #tpu.memory_space<vmem>>, %arg7: memref<1x128xf32, #tpu.memory_space<vmem>>, %arg8: memref<128x128xf32, #tpu.memory_space<vmem>>) attributes {dimension_semantics = [#tpu.dimension_semantics<parallel>], iteration_bounds = array<i64: 1>, scalar_prefetch = 0 : i64, scratch_operands = 0 : i64, tpu.core_type = #tpu.core_type<tc>, window_params = [{transform_indices = @transform_0, window_bounds = array<i64: 128, 128>}, {pipeline_mode = #tpu.pipeline_mode<synchronous>, transform_indices = @transform_1, window_bounds = array<i64: 128, 128>}, {pipeline_mode = #tpu.pipeline_mode<synchronous>, transform_indices = @transform_2, window_bounds = array<i64: 1, 128>}, {pipeline_mode = #tpu.pipeline_mode<synchronous>, transform_indices = @transform_3, window_bounds = array<i64: 128, 128>}, {pipeline_mode = #tpu.pipeline_mode<synchronous>, transform_indices = @transform_4, window_bounds = array<i64: 1, 128>}, {pipeline_mode = #tpu.pipeline_mode<synchronous>, transform_indices = @transform_5, window_bounds = array<i64: 128, 128>}, {pipeline_mode = #tpu.pipeline_mode<synchronous>, transform_indices = @transform_6, window_bounds = array<i64: 1, 128>}, {transform_indices = @transform_7, window_bounds = array<i64: 128, 128>}]} {
    %c0 = arith.constant 0 : index
    %c0_0 = arith.constant 0 : index
    %0 = vector.load %arg1[%c0, %c0_0] : memref<128x128xf32, #tpu.memory_space<vmem>>, vector<128x128xf32>
    %1 = arith.truncf %0 : vector<128x128xf32> to vector<128x128xbf16>
    %c0_1 = arith.constant 0 : index
    %c0_2 = arith.constant 0 : index
    %2 = vector.load %arg2[%c0_1, %c0_2] : memref<128x128xbf16, #tpu.memory_space<vmem>>, vector<128x128xbf16>
    %cst = arith.constant dense<0.000000e+00> : vector<128x128xf32>
    %3 = tpu.matmul %1, %2, %cst {dimension_numbers = #tpu.dot_dimension_numbers<[1], [0], [0], [1], [0, 0, 1, 1], [], []>} : vector<128x128xbf16>, vector<128x128xbf16>, vector<128x128xf32> -> vector<128x128xf32>
    %c0_3 = arith.constant 0 : index
    %c0_4 = arith.constant 0 : index
    %4 = vector.load %arg3[%c0_3, %c0_4] : memref<1x128xf32, #tpu.memory_space<vmem>>, vector<1x128xf32>
    %5 = vector.broadcast %4 : vector<1x128xf32> to vector<128x128xf32>
    %6 = arith.addf %3, %5 : vector<128x128xf32>
    %cst_5 = arith.constant 0.000000e+00 : f32
    %7 = vector.broadcast %cst_5 : f32 to vector<128x128xf32>
    %8 = arith.maximumf %6, %7 : vector<128x128xf32>
    %9 = arith.truncf %8 : vector<128x128xf32> to vector<128x128xbf16>
    %c0_6 = arith.constant 0 : index
    %c0_7 = arith.constant 0 : index
    %10 = vector.load %arg4[%c0_6, %c0_7] : memref<128x128xbf16, #tpu.memory_space<vmem>>, vector<128x128xbf16>
    %cst_8 = arith.constant dense<0.000000e+00> : vector<128x128xf32>
    %11 = tpu.matmul %9, %10, %cst_8 {dimension_numbers = #tpu.dot_dimension_numbers<[1], [0], [0], [1], [0, 0, 1, 1], [], []>} : vector<128x128xbf16>, vector<128x128xbf16>, vector<128x128xf32> -> vector<128x128xf32>
    %c0_9 = arith.constant 0 : index
    %c0_10 = arith.constant 0 : index
    %12 = vector.load %arg5[%c0_9, %c0_10] : memref<1x128xf32, #tpu.memory_space<vmem>>, vector<1x128xf32>
    %13 = vector.broadcast %12 : vector<1x128xf32> to vector<128x128xf32>
    %14 = arith.addf %11, %13 : vector<128x128xf32>
    %cst_11 = arith.constant 0.000000e+00 : f32
    %15 = vector.broadcast %cst_11 : f32 to vector<128x128xf32>
    %16 = arith.maximumf %14, %15 : vector<128x128xf32>
    %17 = arith.truncf %16 : vector<128x128xf32> to vector<128x128xbf16>
    %c0_12 = arith.constant 0 : index
    %c0_13 = arith.constant 0 : index
    %18 = vector.load %arg6[%c0_12, %c0_13] : memref<128x128xbf16, #tpu.memory_space<vmem>>, vector<128x128xbf16>
    %cst_14 = arith.constant dense<0.000000e+00> : vector<128x128xf32>
    %19 = tpu.matmul %17, %18, %cst_14 {dimension_numbers = #tpu.dot_dimension_numbers<[1], [0], [0], [1], [0, 0, 1, 1], [], []>} : vector<128x128xbf16>, vector<128x128xbf16>, vector<128x128xf32> -> vector<128x128xf32>
    %c0_15 = arith.constant 0 : index
    %c0_16 = arith.constant 0 : index
    %20 = vector.load %arg7[%c0_15, %c0_16] : memref<1x128xf32, #tpu.memory_space<vmem>>, vector<1x128xf32>
    %21 = vector.broadcast %20 : vector<1x128xf32> to vector<128x128xf32>
    %22 = arith.addf %19, %21 : vector<128x128xf32>
    %c0_17 = arith.constant 0 : index
    %c0_18 = arith.constant 0 : index
    %23 = vector.load %arg8[%c0_17, %c0_18] : memref<128x128xf32, #tpu.memory_space<vmem>>, vector<128x128xf32>
    tpu.vector_store %arg8[%c0_17, %c0_18], %22 {strides = array<i32>} : memref<128x128xf32, #tpu.memory_space<vmem>>, vector<128x128xf32>,
    return
  }
  func.func @transform_0(%arg0: i32) -> (i32, i32) {
    %c0_i32 = arith.constant 0 : i32
    %c0_i32_0 = arith.constant 0 : i32
    return %arg0, %c0_i32 : i32, i32
  }
  func.func @transform_1(%arg0: i32) -> (i32, i32) {
    %c0_i32 = arith.constant 0 : i32
    %c0_i32_0 = arith.constant 0 : i32
    %c0_i32_1 = arith.constant 0 : i32
    return %c0_i32, %c0_i32_0 : i32, i32
  }
  func.func @transform_2(%arg0: i32) -> (i32, i32) {
    %c0_i32 = arith.constant 0 : i32
    %c0_i32_0 = arith.constant 0 : i32
    %c0_i32_1 = arith.constant 0 : i32
    return %c0_i32, %c0_i32_0 : i32, i32
  }
  func.func @transform_3(%arg0: i32) -> (i32, i32) {
    %c0_i32 = arith.constant 0 : i32
    %c0_i32_0 = arith.constant 0 : i32
    %c0_i32_1 = arith.constant 0 : i32
    return %c0_i32, %c0_i32_0 : i32, i32
  }
  func.func @transform_4(%arg0: i32) -> (i32, i32) {
    %c0_i32 = arith.constant 0 : i32
    %c0_i32_0 = arith.constant 0 : i32
    %c0_i32_1 = arith.constant 0 : i32
    return %c0_i32, %c0_i32_0 : i32, i32
  }
  func.func @transform_5(%arg0: i32) -> (i32, i32) {
    %c0_i32 = arith.constant 0 : i32
    %c0_i32_0 = arith.constant 0 : i32
    %c0_i32_1 = arith.constant 0 : i32
    return %c0_i32, %c0_i32_0 : i32, i32
  }
  func.func @transform_6(%arg0: i32) -> (i32, i32) {
    %c0_i32 = arith.constant 0 : i32
    %c0_i32_0 = arith.constant 0 : i32
    %c0_i32_1 = arith.constant 0 : i32
    return %c0_i32, %c0_i32_0 : i32, i32
  }
  func.func @transform_7(%arg0: i32) -> (i32, i32) {
    %c0_i32 = arith.constant 0 : i32
    %c0_i32_0 = arith.constant 0 : i32
    return %arg0, %c0_i32 : i32, i32
  }
}

</mosaic_0001>

<llo_original>
// kernel: tpu_custom_call.1
$region0: #{tpu_custom_call.1}
  #allocation0 [shape = 'u32[]', space=smem, size = 0x4, offset = 0x4, fixed_abs, tag = 'smem constant byte address 0x4 - core index']
  #allocation1 [shape = 'u32[144,128]{1,0:T(1,128)}', space=vmem, size = 0x12000, scoped, tag = 'internal scratch']
  %s0 = inlined_call_operand.hbm [shape: f32[128,128], index: 0, kind: input, shape index: {}]
  %s1 = inlined_call_operand.hbm [shape: bf16[128,128], index: 1, kind: input, shape index: {}]
  %s2 = inlined_call_operand.vmem [shape: f32[1,128], index: 2, kind: input, shape index: {}]
  %s3 = inlined_call_operand.hbm [shape: bf16[128,128], index: 3, kind: input, shape index: {}]
  %s4 = inlined_call_operand.vmem [shape: f32[1,128], index: 4, kind: input, shape index: {}]
  %s5 = inlined_call_operand.hbm [shape: bf16[128,128], index: 5, kind: input, shape index: {}]
  %s6 = inlined_call_operand.vmem [shape: f32[1,128], index: 6, kind: input, shape index: {}]
  %s7 = inlined_call_operand.hbm [shape: f32[128,128], index: 7, kind: output, shape index: {}]
  %s8 = sld [smem:[#allocation0]]
  $region54: #{tpu_custom_call.1} parent=0
    _
  %s10 = ssub.s32 1, %s8
  %s11 = scalar_select 0, %s10, %s8
  $region1: #{tpu_custom_call.1} parent=0
    #allocation2 [shape = 'u8[65536]{0}', space=vmem, size = 0x10000, scoped, tag = 'input window, operand 0, single buffered']
    #allocation3 [shape = 's32[1]{0}', space=sflag, size = 0x4, scoped, tag = 'scoped memory for tpu_custom_call.1']
    #allocation4 [shape = 's32[1]{0}', space=sflag, size = 0x4, scoped, tag = 'scoped memory for tpu_custom_call.1']
    #allocation5 [shape = 'u8[32768]{0}', space=vmem, size = 0x8000, scoped, tag = 'input window, operand 1, single buffered']
    #allocation6 [shape = 's32[1]{0}', space=sflag, size = 0x4, scoped, tag = 'scoped memory for tpu_custom_call.1']
    #allocation7 [shape = 'u8[32768]{0}', space=vmem, size = 0x8000, scoped, tag = 'input window, operand 3, single buffered']
    #allocation8 [shape = 'u8[32768]{0}', space=vmem, size = 0x8000, scoped, tag = 'input window, operand 5, single buffered']
    #allocation9 [shape = 's32[1]{0}', space=sflag, size = 0x4, scoped, tag = 'scoped memory for tpu_custom_call.1']
    #allocation10 [shape = 'u8[65536]{0}', space=vmem, size = 0x10000, scoped, tag = 'output window, operand 0, single buffered']
    %12 = vsyncpa [#allocation3], 0
    %13 = vsyncpa [#allocation6], 0
    %14 = vsyncpa [#allocation9], 0
    %15 = vsyncpa [#allocation4], 0
    // Predicated region
    $region2: #{tpu_custom_call.1} parent=1 // pred_check
      _
    $region3: #{tpu_custom_call.1} parent=1 // pred_check_branch
      %17 = sbr.rel (0) target = $region5
    $region4: #{tpu_custom_call.1} parent=1 // pred_region
      %s19 = ssub.s32 2048, 2048
      %20 = vsyncadd [#allocation3], %s19
      %s21 = sshll.u32 [#allocation2], 4
      %s22 = int_to_ptr.vmem [resolvable:$true] %s21
      %27 = dma.hbm_to_vmem [thread:$0]  %s0, 2048, %s22, [#allocation3], 128, 128, 8
    $region5: #{tpu_custom_call.1} parent=1 // pred_fallthru
      _
    // Predicated region
    $region6: #{tpu_custom_call.1} parent=1 // pred_check
      _
    $region7: #{tpu_custom_call.1} parent=1 // pred_check_branch
      %29 = sbr.rel (0) target = $region9
    $region8: #{tpu_custom_call.1} parent=1 // pred_region
      %s31 = ssub.s32 1024, 1024
      %32 = vsyncadd [#allocation6], %s31
      %s33 = sshll.u32 [#allocation5], 4
      %s34 = int_to_ptr.vmem [resolvable:$true] %s33
      %39 = dma.hbm_to_vmem [thread:$0]  %s1, 1024, %s34, [#allocation6], 64, 64, 4
    $region9: #{tpu_custom_call.1} parent=1 // pred_fallthru
      _
    // Predicated region
    $region10: #{tpu_custom_call.1} parent=1 // pred_check
      _
    $region11: #{tpu_custom_call.1} parent=1 // pred_check_branch
      %41 = sbr.rel (0) target = $region13
    $region12: #{tpu_custom_call.1} parent=1 // pred_region
      _
    $region13: #{tpu_custom_call.1} parent=1 // pred_fallthru
      _
    // Predicated region
    $region14: #{tpu_custom_call.1} parent=1 // pred_check
      _
    $region15: #{tpu_custom_call.1} parent=1 // pred_check_branch
      %43 = sbr.rel (0) target = $region17
    $region16: #{tpu_custom_call.1} parent=1 // pred_region
      %s45 = ssub.s32 1024, 1024
      %46 = vsyncadd [#allocation6], %s45
      %s47 = sshll.u32 [#allocation7], 4
      %s48 = int_to_ptr.vmem [resolvable:$true] %s47
      %53 = dma.hbm_to_vmem [thread:$0]  %s3, 1024, %s48, [#allocation6], 64, 64, 4
    $region17: #{tpu_custom_call.1} parent=1 // pred_fallthru
      _
    // Predicated region
    $region18: #{tpu_custom_call.1} parent=1 // pred_check
      _
    $region19: #{tpu_custom_call.1} parent=1 // pred_check_branch
      %55 = sbr.rel (0) target = $region21
    $region20: #{tpu_custom_call.1} parent=1 // pred_region
      _
    $region21: #{tpu_custom_call.1} parent=1 // pred_fallthru
      _
    // Predicated region
    $region22: #{tpu_custom_call.1} parent=1 // pred_check
      _
    $region23: #{tpu_custom_call.1} parent=1 // pred_check_branch
      %57 = sbr.rel (0) target = $region25
    $region24: #{tpu_custom_call.1} parent=1 // pred_region
      %s59 = ssub.s32 1024, 1024
      %60 = vsyncadd [#allocation9], %s59
      %s61 = sshll.u32 [#allocation8], 4
      %s62 = int_to_ptr.vmem [resolvable:$true] %s61
      %67 = dma.hbm_to_vmem [thread:$0]  %s5, 1024, %s62, [#allocation9], 64, 64, 4
    $region25: #{tpu_custom_call.1} parent=1 // pred_fallthru
      _
    // Predicated region
    $region26: #{tpu_custom_call.1} parent=1 // pred_check
      _
    $region27: #{tpu_custom_call.1} parent=1 // pred_check_branch
      %69 = sbr.rel (0) target = $region29
    $region28: #{tpu_custom_call.1} parent=1 // pred_region
      _
    $region29: #{tpu_custom_call.1} parent=1 // pred_fallthru
      _
    // Predicated region
    $region30: #{tpu_custom_call.1} parent=1 // pred_check
      _
    $region31: #{tpu_custom_call.1} parent=1 // pred_check_branch
      %71 = sbr.rel (0) target = $region33
    $region32: #{tpu_custom_call.1} parent=1 // pred_region
      %72 = dma.done [#allocation3], 2048
    $region33: #{tpu_custom_call.1} parent=1 // pred_fallthru
      _
    // Predicated region
    $region34: #{tpu_custom_call.1} parent=1 // pred_check
      _
    $region35: #{tpu_custom_call.1} parent=1 // pred_check_branch
      %74 = sbr.rel (0) target = $region37
    $region36: #{tpu_custom_call.1} parent=1 // pred_region
      %75 = dma.done [#allocation6], 1024
    $region37: #{tpu_custom_call.1} parent=1 // pred_fallthru
      _
    // Predicated region
    $region38: #{tpu_custom_call.1} parent=1 // pred_check
      _
    $region39: #{tpu_custom_call.1} parent=1 // pred_check_branch
      %77 = sbr.rel (0) target = $region41
    $region40: #{tpu_custom_call.1} parent=1 // pred_region
      %78 = dma.done [#allocation6], 1024
    $region41: #{tpu_custom_call.1} parent=1 // pred_fallthru
      _
    // Predicated region
    $region42: #{tpu_custom_call.1} parent=1 // pred_check
      _
    $region43: #{tpu_custom_call.1} parent=1 // pred_check_branch
      %80 = sbr.rel (0) target = $region45
    $region44: #{tpu_custom_call.1} parent=1 // pred_region
      %81 = dma.done [#allocation9], 1024
    $region45: #{tpu_custom_call.1} parent=1 // pred_fallthru
      _
    %v83 = vld [vmem:[#allocation2] sm:$0xff]
    %v84 = vld [vmem:[#allocation2 + $0x8] sm:$0xff]
    %v85 = vld [vmem:[#allocation2 + $0x10] sm:$0xff]
    %v86 = vld [vmem:[#allocation2 + $0x18] sm:$0xff]
    %v87 = vld [vmem:[#allocation2 + $0x20] sm:$0xff]
    %v88 = vld [vmem:[#allocation2 + $0x28] sm:$0xff]
    %v89 = vld [vmem:[#allocation2 + $0x30] sm:$0xff]
    %v90 = vld [vmem:[#allocation2 + $0x38] sm:$0xff]
    %v91 = vld [vmem:[#allocation2 + $0x40] sm:$0xff]
    %v92 = vld [vmem:[#allocation2 + $0x48] sm:$0xff]
    %v93 = vld [vmem:[#allocation2 + $0x50] sm:$0xff]
    %v94 = vld [vmem:[#allocation2 + $0x58] sm:$0xff]
    %v95 = vld [vmem:[#allocation2 + $0x60] sm:$0xff]
    %v96 = vld [vmem:[#allocation2 + $0x68] sm:$0xff]
    %v97 = vld [vmem:[#allocation2 + $0x70] sm:$0xff]
    %v98 = vld [vmem:[#allocation2 + $0x78] sm:$0xff]
    %v99 = vpack.c.bf16 %v84, %v83
    %v100 = vpack.c.bf16 %v86, %v85
    %v101 = vpack.c.bf16 %v88, %v87
    %v102 = vpack.c.bf16 %v90, %v89
    %v103 = vpack.c.bf16 %v92, %v91
    %v104 = vpack.c.bf16 %v94, %v93
    %v105 = vpack.c.bf16 %v96, %v95
    %v106 = vpack.c.bf16 %v98, %v97
    %v107 = vld [vmem:[#allocation5] sm:$0xf]
    %v108 = vld [vmem:[#allocation5 + $0x4] sm:$0xf]
    %v109 = vld [vmem:[#allocation5 + $0x8] sm:$0xf]
    %v110 = vld [vmem:[#allocation5 + $0xc] sm:$0xf]
    %v111 = vld [vmem:[#allocation5 + $0x10] sm:$0xf]
    %v112 = vld [vmem:[#allocation5 + $0x14] sm:$0xf]
    %v113 = vld [vmem:[#allocation5 + $0x18] sm:$0xf]
    %v114 = vld [vmem:[#allocation5 + $0x1c] sm:$0xf]
    %v115 = vld [vmem:[#allocation5 + $0x20] sm:$0xf]
    %v116 = vld [vmem:[#allocation5 + $0x24] sm:$0xf]
    %v117 = vld [vmem:[#allocation5 + $0x28] sm:$0xf]
    %v118 = vld [vmem:[#allocation5 + $0x2c] sm:$0xf]
    %v119 = vld [vmem:[#allocation5 + $0x30] sm:$0xf]
    %v120 = vld [vmem:[#allocation5 + $0x34] sm:$0xf]
    %v121 = vld [vmem:[#allocation5 + $0x38] sm:$0xf]
    %v122 = vld [vmem:[#allocation5 + $0x3c] sm:$0xf]
    %v123 = vld [vmem:[%s2] sm:$0x1]
    %v125 = vlaneseq
    %v126 = vshrl.u32 %v125, 7
    %v127 = vsub.s32 0, %v126
    %v128 = vrot.slane %v123, %v127
    %v146 = vunpack.c.l.b16 %v107
    %v147 = vunpack.c.l.b16 %v108
    %v148 = vunpack.c.l.b16 %v109
    %v149 = vunpack.c.l.b16 %v110
    %v150 = vunpack.c.l.b16 %v111
    %v151 = vunpack.c.l.b16 %v112
    %v152 = vunpack.c.l.b16 %v113
    %v153 = vunpack.c.l.b16 %v114
    %v154 = vunpack.c.l.b16 %v115
    %v155 = vunpack.c.l.b16 %v116
    %v156 = vunpack.c.l.b16 %v117
    %v157 = vunpack.c.l.b16 %v118
    %v158 = vunpack.c.l.b16 %v119
    %v159 = vunpack.c.l.b16 %v120
    %v160 = vunpack.c.l.b16 %v121
    %v161 = vunpack.c.l.b16 %v122
    %v162 = vpack.c.b16 %v147, %v146
    %v163 = vpack.c.b16 %v149, %v148
    %v164 = vpack.c.b16 %v151, %v150
    %v165 = vpack.c.b16 %v153, %v152
    %v166 = vpack.c.b16 %v155, %v154
    %v167 = vpack.c.b16 %v157, %v156
    %v168 = vpack.c.b16 %v159, %v158
    %v169 = vpack.c.b16 %v161, %v160
    %178 = vmatprep.subr.bf16.mxu0 0
    %179 = vmatpush1.bf16.msra.mxu0 %v169
    %180 = vmatprep.subr.bf16.mxu0 0
    %181 = vmatpush1.bf16.msra.mxu0 %v168
    %182 = vmatprep.subr.bf16.mxu0 0
    %183 = vmatpush1.bf16.msra.mxu0 %v167
    %184 = vmatprep.subr.bf16.mxu0 0
    %185 = vmatpush1.bf16.msra.mxu0 %v166
    %186 = vmatprep.subr.bf16.mxu0 0
    %187 = vmatpush1.bf16.msra.mxu0 %v165
    %188 = vmatprep.subr.bf16.mxu0 0
    %189 = vmatpush1.bf16.msra.mxu0 %v164
    %190 = vmatprep.subr.bf16.mxu0 0
    %191 = vmatpush1.bf16.msra.mxu0 %v163
    %192 = vmatprep.subr.bf16.mxu0 0
    %193 = vmatpush1.bf16.msra.mxu0 %v162
    %194 = vmatprep.subr.bf16.mxu0 0
    %195 = vmatpush2.bf16.msra.mxu0 0
    %196 = vmatprep.subr.bf16.mxu0 0
    %197 = vmatpush2.bf16.msra.mxu0 0
    %198 = vmatprep.subr.bf16.mxu0 0
    %199 = vmatpush2.bf16.msra.mxu0 0
    %200 = vmatprep.subr.bf16.mxu0 0
    %201 = vmatpush2.bf16.msra.mxu0 0
    %202 = vmatprep.subr.bf16.mxu0 0
    %203 = vmatpush2.bf16.msra.mxu0 0
    %204 = vmatprep.subr.bf16.mxu0 0
    %205 = vmatpush2.bf16.msra.mxu0 0
    %206 = vmatprep.subr.bf16.mxu0 0
    %207 = vmatpush2.bf16.msra.mxu0 0
    %208 = vmatprep.subr.bf16.mxu0 0
    %209 = vmatpush2.bf16.msra.mxu0 0
    %210 = vmatprep.mubr.bf16.mxu0 0
    %211 = vmatmul.mubr.bf16.gmra.mxu0 %v99
    %v212 = vpop.f32.mrf.mxu0
    %v213 = vadd.f32 %v128, %v212
    %v214 = vpop.f32.mrf.mxu0
    %v215 = vpop.f32.mrf.mxu0
    %v216 = vadd.f32 %v128, %v215
    %v217 = vpop.f32.mrf.mxu0
    %218 = vmatprep.mubr.bf16.mxu0 0
    %219 = vmatmul.mubr.bf16.gmra.mxu0 %v100
    %v220 = vpop.f32.mrf.mxu0
    %v221 = vadd.f32 %v128, %v220
    %v222 = vpop.f32.mrf.mxu0
    %v223 = vpop.f32.mrf.mxu0
    %v224 = vadd.f32 %v128, %v223
    %v225 = vpop.f32.mrf.mxu0
    %226 = vmatprep.mubr.bf16.mxu0 0
    %227 = vmatmul.mubr.bf16.gmra.mxu0 %v101
    %v228 = vpop.f32.mrf.mxu0
    %v229 = vadd.f32 %v128, %v228
    %v230 = vpop.f32.mrf.mxu0
    %v231 = vpop.f32.mrf.mxu0
    %v232 = vadd.f32 %v128, %v231
    %v233 = vpop.f32.mrf.mxu0
    %234 = vmatprep.mubr.bf16.mxu0 0
    %235 = vmatmul.mubr.bf16.gmra.mxu0 %v102
    %v236 = vpop.f32.mrf.mxu0
    %v237 = vadd.f32 %v128, %v236
    %v238 = vpop.f32.mrf.mxu0
    %v239 = vpop.f32.mrf.mxu0
    %v240 = vadd.f32 %v128, %v239
    %v241 = vpop.f32.mrf.mxu0
    %242 = vmatprep.mubr.bf16.mxu0 0
    %243 = vmatmul.mubr.bf16.gmra.mxu0 %v103
    %v244 = vpop.f32.mrf.mxu0
    %v245 = vadd.f32 %v128, %v244
    %v246 = vpop.f32.mrf.mxu0
    %v247 = vpop.f32.mrf.mxu0
    %v248 = vadd.f32 %v128, %v247
    %v249 = vpop.f32.mrf.mxu0
    %250 = vmatprep.mubr.bf16.mxu0 0
    %251 = vmatmul.mubr.bf16.gmra.mxu0 %v104
    %v252 = vpop.f32.mrf.mxu0
    %v253 = vadd.f32 %v128, %v252
    %v254 = vpop.f32.mrf.mxu0
    %v255 = vpop.f32.mrf.mxu0
    %v256 = vadd.f32 %v128, %v255
    %v257 = vpop.f32.mrf.mxu0
    %258 = vmatprep.mubr.bf16.mxu0 0
    %259 = vmatmul.mubr.bf16.gmra.mxu0 %v105
    %v260 = vpop.f32.mrf.mxu0
    %v261 = vadd.f32 %v128, %v260
    %v262 = vpop.f32.mrf.mxu0
    %v263 = vpop.f32.mrf.mxu0
    %v264 = vadd.f32 %v128, %v263
    %v265 = vpop.f32.mrf.mxu0
    %266 = vmatprep.mubr.bf16.mxu0 0
    %267 = vmatmul.mubr.bf16.gmra.mxu0 %v106
    %v268 = vpop.f32.mrf.mxu0
    %v269 = vadd.f32 %v128, %v268
    %v270 = vpop.f32.mrf.mxu0
    %v271 = vpop.f32.mrf.mxu0
    %v272 = vadd.f32 %v128, %v271
    %v273 = vpop.f32.mrf.mxu0
    %274 = vdwg.mxu0
    %v275 = vmax.f32 %v213, 0.0
    %v276 = vmax.f32 %v216, 0.0
    %v277 = vmax.f32 %v221, 0.0
    %v278 = vmax.f32 %v224, 0.0
    %v279 = vmax.f32 %v229, 0.0
    %v280 = vmax.f32 %v232, 0.0
    %v281 = vmax.f32 %v237, 0.0
    %v282 = vmax.f32 %v240, 0.0
    %v283 = vmax.f32 %v245, 0.0
    %v284 = vmax.f32 %v248, 0.0
    %v285 = vmax.f32 %v253, 0.0
    %v286 = vmax.f32 %v256, 0.0
    %v287 = vmax.f32 %v261, 0.0
    %v288 = vmax.f32 %v264, 0.0
    %v289 = vmax.f32 %v269, 0.0
    %v290 = vmax.f32 %v272, 0.0
    %v291 = vpack.c.bf16 %v276, %v275
    %v292 = vpack.c.bf16 %v278, %v277
    %v293 = vpack.c.bf16 %v280, %v279
    %v294 = vpack.c.bf16 %v282, %v281
    %v295 = vpack.c.bf16 %v284, %v283
    %v296 = vpack.c.bf16 %v286, %v285
    %v297 = vpack.c.bf16 %v288, %v287
    %v298 = vpack.c.bf16 %v290, %v289
    %v299 = vld [vmem:[#allocation7] sm:$0xf]
    %v300 = vld [vmem:[#allocation7 + $0x4] sm:$0xf]
    %v301 = vld [vmem:[#allocation7 + $0x8] sm:$0xf]
    %v302 = vld [vmem:[#allocation7 + $0xc] sm:$0xf]
    %v303 = vld [vmem:[#allocation7 + $0x10] sm:$0xf]
    %v304 = vld [vmem:[#allocation7 + $0x14] sm:$0xf]
    %v305 = vld [vmem:[#allocation7 + $0x18] sm:$0xf]
    %v306 = vld [vmem:[#allocation7 + $0x1c] sm:$0xf]
    %v307 = vld [vmem:[#allocation7 + $0x20] sm:$0xf]
    %v308 = vld [vmem:[#allocation7 + $0x24] sm:$0xf]
    %v309 = vld [vmem:[#allocation7 + $0x28] sm:$0xf]
    %v310 = vld [vmem:[#allocation7 + $0x2c] sm:$0xf]
    %v311 = vld [vmem:[#allocation7 + $0x30] sm:$0xf]
    %v312 = vld [vmem:[#allocation7 + $0x34] sm:$0xf]
    %v313 = vld [vmem:[#allocation7 + $0x38] sm:$0xf]
    %v314 = vld [vmem:[#allocation7 + $0x3c] sm:$0xf]
    %v315 = vld [vmem:[%s4] sm:$0x1]
    %v317 = vlaneseq
    %v318 = vshrl.u32 %v317, 7
    %v319 = vsub.s32 0, %v318
    %v320 = vrot.slane %v315, %v319
    %v338 = vunpack.c.l.b16 %v299
    %v339 = vunpack.c.l.b16 %v300
    %v340 = vunpack.c.l.b16 %v301
    %v341 = vunpack.c.l.b16 %v302
    %v342 = vunpack.c.l.b16 %v303
    %v343 = vunpack.c.l.b16 %v304
    %v344 = vunpack.c.l.b16 %v305
    %v345 = vunpack.c.l.b16 %v306
    %v346 = vunpack.c.l.b16 %v307
    %v347 = vunpack.c.l.b16 %v308
    %v348 = vunpack.c.l.b16 %v309
    %v349 = vunpack.c.l.b16 %v310
    %v350 = vunpack.c.l.b16 %v311
    %v351 = vunpack.c.l.b16 %v312
    %v352 = vunpack.c.l.b16 %v313
    %v353 = vunpack.c.l.b16 %v314
    %v354 = vpack.c.b16 %v339, %v338
    %v355 = vpack.c.b16 %v341, %v340
    %v356 = vpack.c.b16 %v343, %v342
    %v357 = vpack.c.b16 %v345, %v344
    %v358 = vpack.c.b16 %v347, %v346
    %v359 = vpack.c.b16 %v349, %v348
    %v360 = vpack.c.b16 %v351, %v350
    %v361 = vpack.c.b16 %v353, %v352
    %370 = vmatprep.subr.bf16.mxu0 0
    %371 = vmatpush1.bf16.msra.mxu0 %v361
    %372 = vmatprep.subr.bf16.mxu0 0
    %373 = vmatpush1.bf16.msra.mxu0 %v360
    %374 = vmatprep.subr.bf16.mxu0 0
    %375 = vmatpush1.bf16.msra.mxu0 %v359
    %376 = vmatprep.subr.bf16.mxu0 0
    %377 = vmatpush1.bf16.msra.mxu0 %v358
    %378 = vmatprep.subr.bf16.mxu0 0
    %379 = vmatpush1.bf16.msra.mxu0 %v357
    %380 = vmatprep.subr.bf16.mxu0 0
    %381 = vmatpush1.bf16.msra.mxu0 %v356
    %382 = vmatprep.subr.bf16.mxu0 0
    %383 = vmatpush1.bf16.msra.mxu0 %v355
    %384 = vmatprep.subr.bf16.mxu0 0
    %385 = vmatpush1.bf16.msra.mxu0 %v354
    %386 = vmatprep.subr.bf16.mxu0 0
    %387 = vmatpush2.bf16.msra.mxu0 0
    %388 = vmatprep.subr.bf16.mxu0 0
    %389 = vmatpush2.bf16.msra.mxu0 0
    %390 = vmatprep.subr.bf16.mxu0 0
    %391 = vmatpush2.bf16.msra.mxu0 0
    %392 = vmatprep.subr.bf16.mxu0 0
    %393 = vmatpush2.bf16.msra.mxu0 0
    %394 = vmatprep.subr.bf16.mxu0 0
    %395 = vmatpush2.bf16.msra.mxu0 0
    %396 = vmatprep.subr.bf16.mxu0 0
    %397 = vmatpush2.bf16.msra.mxu0 0
    %398 = vmatprep.subr.bf16.mxu0 0
    %399 = vmatpush2.bf16.msra.mxu0 0
    %400 = vmatprep.subr.bf16.mxu0 0
    %401 = vmatpush2.bf16.msra.mxu0 0
    %402 = vmatprep.mubr.bf16.mxu0 0
    %403 = vmatmul.mubr.bf16.gmra.mxu0 %v291
    %v404 = vpop.f32.mrf.mxu0
    %v405 = vadd.f32 %v320, %v404
    %v406 = vpop.f32.mrf.mxu0
    %v407 = vpop.f32.mrf.mxu0
    %v408 = vadd.f32 %v320, %v407
    %v409 = vpop.f32.mrf.mxu0
    %410 = vmatprep.mubr.bf16.mxu0 0
    %411 = vmatmul.mubr.bf16.gmra.mxu0 %v292
    %v412 = vpop.f32.mrf.mxu0
    %v413 = vadd.f32 %v320, %v412
    %v414 = vpop.f32.mrf.mxu0
    %v415 = vpop.f32.mrf.mxu0
    %v416 = vadd.f32 %v320, %v415
    %v417 = vpop.f32.mrf.mxu0
    %418 = vmatprep.mubr.bf16.mxu0 0
    %419 = vmatmul.mubr.bf16.gmra.mxu0 %v293
    %v420 = vpop.f32.mrf.mxu0
    %v421 = vadd.f32 %v320, %v420
    %v422 = vpop.f32.mrf.mxu0
    %v423 = vpop.f32.mrf.mxu0
    %v424 = vadd.f32 %v320, %v423
    %v425 = vpop.f32.mrf.mxu0
    %426 = vmatprep.mubr.bf16.mxu0 0
    %427 = vmatmul.mubr.bf16.gmra.mxu0 %v294
    %v428 = vpop.f32.mrf.mxu0
    %v429 = vadd.f32 %v320, %v428
    %v430 = vpop.f32.mrf.mxu0
    %v431 = vpop.f32.mrf.mxu0
    %v432 = vadd.f32 %v320, %v431
    %v433 = vpop.f32.mrf.mxu0
    %434 = vmatprep.mubr.bf16.mxu0 0
    %435 = vmatmul.mubr.bf16.gmra.mxu0 %v295
    %v436 = vpop.f32.mrf.mxu0
    %v437 = vadd.f32 %v320, %v436
    %v438 = vpop.f32.mrf.mxu0
    %v439 = vpop.f32.mrf.mxu0
    %v440 = vadd.f32 %v320, %v439
    %v441 = vpop.f32.mrf.mxu0
    %442 = vmatprep.mubr.bf16.mxu0 0
    %443 = vmatmul.mubr.bf16.gmra.mxu0 %v296
    %v444 = vpop.f32.mrf.mxu0
    %v445 = vadd.f32 %v320, %v444
    %v446 = vpop.f32.mrf.mxu0
    %v447 = vpop.f32.mrf.mxu0
    %v448 = vadd.f32 %v320, %v447
    %v449 = vpop.f32.mrf.mxu0
    %450 = vmatprep.mubr.bf16.mxu0 0
    %451 = vmatmul.mubr.bf16.gmra.mxu0 %v297
    %v452 = vpop.f32.mrf.mxu0
    %v453 = vadd.f32 %v320, %v452
    %v454 = vpop.f32.mrf.mxu0
    %v455 = vpop.f32.mrf.mxu0
    %v456 = vadd.f32 %v320, %v455
    %v457 = vpop.f32.mrf.mxu0
    %458 = vmatprep.mubr.bf16.mxu0 0
    %459 = vmatmul.mubr.bf16.gmra.mxu0 %v298
    %v460 = vpop.f32.mrf.mxu0
    %v461 = vadd.f32 %v320, %v460
    %v462 = vpop.f32.mrf.mxu0
    %v463 = vpop.f32.mrf.mxu0
    %v464 = vadd.f32 %v320, %v463
    %v465 = vpop.f32.mrf.mxu0
    %466 = vdwg.mxu0
    %v467 = vmax.f32 %v405, 0.0
    %v468 = vmax.f32 %v408, 0.0
    %v469 = vmax.f32 %v413, 0.0
    %v470 = vmax.f32 %v416, 0.0
    %v471 = vmax.f32 %v421, 0.0
    %v472 = vmax.f32 %v424, 0.0
    %v473 = vmax.f32 %v429, 0.0
    %v474 = vmax.f32 %v432, 0.0
    %v475 = vmax.f32 %v437, 0.0
    %v476 = vmax.f32 %v440, 0.0
    %v477 = vmax.f32 %v445, 0.0
    %v478 = vmax.f32 %v448, 0.0
    %v479 = vmax.f32 %v453, 0.0
    %v480 = vmax.f32 %v456, 0.0
    %v481 = vmax.f32 %v461, 0.0
    %v482 = vmax.f32 %v464, 0.0
    %v483 = vpack.c.bf16 %v468, %v467
    %v484 = vpack.c.bf16 %v470, %v469
    %v485 = vpack.c.bf16 %v472, %v471
    %v486 = vpack.c.bf16 %v474, %v473
    %v487 = vpack.c.bf16 %v476, %v475
    %v488 = vpack.c.bf16 %v478, %v477
    %v489 = vpack.c.bf16 %v480, %v479
    %v490 = vpack.c.bf16 %v482, %v481
    %v491 = vld [vmem:[#allocation8] sm:$0xf]
    %v492 = vld [vmem:[#allocation8 + $0x4] sm:$0xf]
    %v493 = vld [vmem:[#allocation8 + $0x8] sm:$0xf]
    %v494 = vld [vmem:[#allocation8 + $0xc] sm:$0xf]
    %v495 = vld [vmem:[#allocation8 + $0x10] sm:$0xf]
    %v496 = vld [vmem:[#allocation8 + $0x14] sm:$0xf]
    %v497 = vld [vmem:[#allocation8 + $0x18] sm:$0xf]
    %v498 = vld [vmem:[#allocation8 + $0x1c] sm:$0xf]
    %v499 = vld [vmem:[#allocation8 + $0x20] sm:$0xf]
    %v500 = vld [vmem:[#allocation8 + $0x24] sm:$0xf]
    %v501 = vld [vmem:[#allocation8 + $0x28] sm:$0xf]
    %v502 = vld [vmem:[#allocation8 + $0x2c] sm:$0xf]
    %v503 = vld [vmem:[#allocation8 + $0x30] sm:$0xf]
    %v504 = vld [vmem:[#allocation8 + $0x34] sm:$0xf]
    %v505 = vld [vmem:[#allocation8 + $0x38] sm:$0xf]
    %v506 = vld [vmem:[#allocation8 + $0x3c] sm:$0xf]
    %v507 = vld [vmem:[%s6] sm:$0x1]
    %v509 = vlaneseq
    %v510 = vshrl.u32 %v509, 7
    %v511 = vsub.s32 0, %v510
    %v512 = vrot.slane %v507, %v511
    %v530 = vunpack.c.l.b16 %v491
    %v531 = vunpack.c.l.b16 %v492
    %v532 = vunpack.c.l.b16 %v493
    %v533 = vunpack.c.l.b16 %v494
    %v534 = vunpack.c.l.b16 %v495
    %v535 = vunpack.c.l.b16 %v496
    %v536 = vunpack.c.l.b16 %v497
    %v537 = vunpack.c.l.b16 %v498
    %v538 = vunpack.c.l.b16 %v499
    %v539 = vunpack.c.l.b16 %v500
    %v540 = vunpack.c.l.b16 %v501
    %v541 = vunpack.c.l.b16 %v502
    %v542 = vunpack.c.l.b16 %v503
    %v543 = vunpack.c.l.b16 %v504
    %v544 = vunpack.c.l.b16 %v505
    %v545 = vunpack.c.l.b16 %v506
    %v546 = vpack.c.b16 %v531, %v530
    %v547 = vpack.c.b16 %v533, %v532
    %v548 = vpack.c.b16 %v535, %v534
    %v549 = vpack.c.b16 %v537, %v536
    %v550 = vpack.c.b16 %v539, %v538
    %v551 = vpack.c.b16 %v541, %v540
    %v552 = vpack.c.b16 %v543, %v542
    %v553 = vpack.c.b16 %v545, %v544
    %562 = vmatprep.subr.bf16.mxu0 0
    %563 = vmatpush1.bf16.msra.mxu0 %v553
    %564 = vmatprep.subr.bf16.mxu0 0
    %565 = vmatpush1.bf16.msra.mxu0 %v552
    %566 = vmatprep.subr.bf16.mxu0 0
    %567 = vmatpush1.bf16.msra.mxu0 %v551
    %568 = vmatprep.subr.bf16.mxu0 0
    %569 = vmatpush1.bf16.msra.mxu0 %v550
    %570 = vmatprep.subr.bf16.mxu0 0
    %571 = vmatpush1.bf16.msra.mxu0 %v549
    %572 = vmatprep.subr.bf16.mxu0 0
    %573 = vmatpush1.bf16.msra.mxu0 %v548
    %574 = vmatprep.subr.bf16.mxu0 0
    %575 = vmatpush1.bf16.msra.mxu0 %v547
    %576 = vmatprep.subr.bf16.mxu0 0
    %577 = vmatpush1.bf16.msra.mxu0 %v546
    %578 = vmatprep.subr.bf16.mxu0 0
    %579 = vmatpush2.bf16.msra.mxu0 0
    %580 = vmatprep.subr.bf16.mxu0 0
    %581 = vmatpush2.bf16.msra.mxu0 0
    %582 = vmatprep.subr.bf16.mxu0 0
    %583 = vmatpush2.bf16.msra.mxu0 0
    %584 = vmatprep.subr.bf16.mxu0 0
    %585 = vmatpush2.bf16.msra.mxu0 0
    %586 = vmatprep.subr.bf16.mxu0 0
    %587 = vmatpush2.bf16.msra.mxu0 0
    %588 = vmatprep.subr.bf16.mxu0 0
    %589 = vmatpush2.bf16.msra.mxu0 0
    %590 = vmatprep.subr.bf16.mxu0 0
    %591 = vmatpush2.bf16.msra.mxu0 0
    %592 = vmatprep.subr.bf16.mxu0 0
    %593 = vmatpush2.bf16.msra.mxu0 0
    %594 = vmatprep.mubr.bf16.mxu0 0
    %595 = vmatmul.mubr.bf16.gmra.mxu0 %v483
    %v596 = vpop.f32.mrf.mxu0
    %v597 = vadd.f32 %v512, %v596
    %v598 = vpop.f32.mrf.mxu0
    %v599 = vpop.f32.mrf.mxu0
    %v600 = vadd.f32 %v512, %v599
    %v601 = vpop.f32.mrf.mxu0
    %602 = vmatprep.mubr.bf16.mxu0 0
    %603 = vmatmul.mubr.bf16.gmra.mxu0 %v484
    %v604 = vpop.f32.mrf.mxu0
    %v605 = vadd.f32 %v512, %v604
    %v606 = vpop.f32.mrf.mxu0
    %v607 = vpop.f32.mrf.mxu0
    %v608 = vadd.f32 %v512, %v607
    %v609 = vpop.f32.mrf.mxu0
    %610 = vmatprep.mubr.bf16.mxu0 0
    %611 = vmatmul.mubr.bf16.gmra.mxu0 %v485
    %v612 = vpop.f32.mrf.mxu0
    %v613 = vadd.f32 %v512, %v612
    %v614 = vpop.f32.mrf.mxu0
    %v615 = vpop.f32.mrf.mxu0
    %v616 = vadd.f32 %v512, %v615
    %v617 = vpop.f32.mrf.mxu0
    %618 = vmatprep.mubr.bf16.mxu0 0
    %619 = vmatmul.mubr.bf16.gmra.mxu0 %v486
    %v620 = vpop.f32.mrf.mxu0
    %v621 = vadd.f32 %v512, %v620
    %v622 = vpop.f32.mrf.mxu0
    %v623 = vpop.f32.mrf.mxu0
    %v624 = vadd.f32 %v512, %v623
    %v625 = vpop.f32.mrf.mxu0
    %626 = vmatprep.mubr.bf16.mxu0 0
    %627 = vmatmul.mubr.bf16.gmra.mxu0 %v487
    %v628 = vpop.f32.mrf.mxu0
    %v629 = vadd.f32 %v512, %v628
    %v630 = vpop.f32.mrf.mxu0
    %v631 = vpop.f32.mrf.mxu0
    %v632 = vadd.f32 %v512, %v631
    %v633 = vpop.f32.mrf.mxu0
    %634 = vmatprep.mubr.bf16.mxu0 0
    %635 = vmatmul.mubr.bf16.gmra.mxu0 %v488
    %v636 = vpop.f32.mrf.mxu0
    %v637 = vadd.f32 %v512, %v636
    %v638 = vpop.f32.mrf.mxu0
    %v639 = vpop.f32.mrf.mxu0
    %v640 = vadd.f32 %v512, %v639
    %v641 = vpop.f32.mrf.mxu0
    %642 = vmatprep.mubr.bf16.mxu0 0
    %643 = vmatmul.mubr.bf16.gmra.mxu0 %v489
    %v644 = vpop.f32.mrf.mxu0
    %v645 = vadd.f32 %v512, %v644
    %v646 = vpop.f32.mrf.mxu0
    %v647 = vpop.f32.mrf.mxu0
    %v648 = vadd.f32 %v512, %v647
    %v649 = vpop.f32.mrf.mxu0
    %650 = vmatprep.mubr.bf16.mxu0 0
    %651 = vmatmul.mubr.bf16.gmra.mxu0 %v490
    %v652 = vpop.f32.mrf.mxu0
    %v653 = vadd.f32 %v512, %v652
    %v654 = vpop.f32.mrf.mxu0
    %v655 = vpop.f32.mrf.mxu0
    %v656 = vadd.f32 %v512, %v655
    %v657 = vpop.f32.mrf.mxu0
    %658 = vdwg.mxu0
    %659 = vst [vmem:[#allocation10] sm:$0xff] %v597
    %660 = vst [vmem:[#allocation10 + $0x8] sm:$0xff] %v600
    %661 = vst [vmem:[#allocation10 + $0x10] sm:$0xff] %v605
    %662 = vst [vmem:[#allocation10 + $0x18] sm:$0xff] %v608
    %663 = vst [vmem:[#allocation10 + $0x20] sm:$0xff] %v613
    %664 = vst [vmem:[#allocation10 + $0x28] sm:$0xff] %v616
    %665 = vst [vmem:[#allocation10 + $0x30] sm:$0xff] %v621
    %666 = vst [vmem:[#allocation10 + $0x38] sm:$0xff] %v624
    %667 = vst [vmem:[#allocation10 + $0x40] sm:$0xff] %v629
    %668 = vst [vmem:[#allocation10 + $0x48] sm:$0xff] %v632
    %669 = vst [vmem:[#allocation10 + $0x50] sm:$0xff] %v637
    %670 = vst [vmem:[#allocation10 + $0x58] sm:$0xff] %v640
    %671 = vst [vmem:[#allocation10 + $0x60] sm:$0xff] %v645
    %672 = vst [vmem:[#allocation10 + $0x68] sm:$0xff] %v648
    %673 = vst [vmem:[#allocation10 + $0x70] sm:$0xff] %v653
    %674 = vst [vmem:[#allocation10 + $0x78] sm:$0xff] %v656
    // Predicated region
    $region46: #{tpu_custom_call.1} parent=1 // pred_check
      _
    $region47: #{tpu_custom_call.1} parent=1 // pred_check_branch
      %676 = sbr.rel (0) target = $region49
    $region48: #{tpu_custom_call.1} parent=1 // pred_region
      %s678 = ssub.s32 2048, 2048
      %679 = vsyncadd [#allocation4], %s678
      %s680 = sshll.u32 [#allocation10], 4
      %s681 = int_to_ptr.vmem [resolvable:$true] %s680
      %686 = dma.vmem_to_hbm [thread:$0]  %s681, 2048, %s7, [#allocation4], 128, 128, 8
    $region49: #{tpu_custom_call.1} parent=1 // pred_fallthru
      _
    // Predicated region
    $region50: #{tpu_custom_call.1} parent=1 // pred_check
      _
    $region51: #{tpu_custom_call.1} parent=1 // pred_check_branch
      %688 = sbr.rel (0) target = $region53
    $region52: #{tpu_custom_call.1} parent=1 // pred_region
      %689 = dma.done [#allocation4], 2048
    $region53: #{tpu_custom_call.1} parent=1 // pred_fallthru
      _
    %690 = vsyncpa [#allocation3], 1
    %691 = vsyncpa [#allocation6], 1
    %692 = vsyncpa [#allocation9], 1
    %693 = vsyncpa [#allocation4], 1

</llo_original>
